<compile_context>
chip_gen: v5e
topology: v5e:2x2
jax: 0.10.0
libtpu: 0.0.40
codegen_flags: <defaults>
</compile_context>

<pallas_src>
import jax
import jax.numpy as jnp
from jax.experimental import pallas as pl
from jax.experimental.pallas import tpu as pltpu


def _round_up(a, b):
    return (a + b - 1) // b * b


def _cdiv(a, b):
    return (a + b - 1) // b


def _vmem_budget_bytes():
    """Per-generation budget for the pipeline working set (stays well under the
    default scoped VMEM limit: 16 MiB on v5e, 32 MiB on v6e/v7x)."""
    try:
        cap = pltpu.get_tpu_info().vmem_capacity_bytes
    except Exception:
        cap = 128 * 1024 * 1024
    return max(2 * 1024 * 1024, min(cap // 16, 8 * 1024 * 1024))


def center_loss(x, y, center, lamda, *, tile_n=None, num_splits=None):
    """x: (N, F) float, y: (N,) int labels in [0, C), center: (C, F) float."""
    x = jnp.asarray(x, jnp.float32)
    center = jnp.asarray(center, jnp.float32)
    y = jnp.asarray(y, jnp.int32)
    n, f = x.shape
    c = center.shape[0]
    c_pad = _round_up(max(c, 8), 8)
    w = 2 * f + 1  # [ sum_x (F) | sum_x^2 (F) | count (1) ] per class

    # ---- tile sizing against the VMEM budget (x dbl-buffer + onehot + rhs) ----
    # TODO(synk): for very large cls_num, replace the (C_pad, TILE_N) one-hot
    # with a scalar-prefetch row gather + SMEM histogram instead of shrinking
    # the tile.
    if tile_n is None:
        per_row_bytes = 4 * (6 * f + c_pad + 8)
        tile_n = max(128, (_vmem_budget_bytes() // per_row_bytes) // 128 * 128)
        tile_n = min(tile_n, 8192)
    tile_n = max(8, min(tile_n, _round_up(n, 8)))
    tile_n = _round_up(tile_n, 8)

    n_tiles = _cdiv(n, tile_n)

    # Leading "parallel" axis: only split when every split gets >= 4 full tiles
    # (so the pipeline warms up and no block index falls past the array).
    if num_splits is None:
        num_splits = 2
    num_splits = max(1, num_splits)
    if n_tiles % num_splits != 0 or n_tiles // num_splits < 4:
        num_splits = 1
    tiles_per_split = n_tiles // num_splits

    # Pad only y (cheap); padded labels are -1 -> match no class.
    n_pad = n_tiles * tile_n
    y_p = jnp.pad(y, (0, n_pad - n), constant_values=-1) if n_pad != n else y
    y3 = y_p.reshape(n_tiles, 1, tile_n)

    def kernel(y_ref, x_ref, stat_ref):
        i = pl.program_id(1)

        @pl.when(i == 0)
        def _init():
            stat_ref[...] = jnp.zeros_like(stat_ref)

        row_tile = pl.program_id(0) * tiles_per_split + i
        y_row = y_ref[0]          # (1, tile_n) int32; -1 for padded labels
        x_t = x_ref[...]          # (tile_n, f); tail rows of last block = garbage

        # Row-validity mask: the batch size n is static, so no scalar input.
        rows = jax.lax.broadcasted_iota(jnp.int32, (tile_n, 1), 0)
        valid = (row_tile * tile_n + rows) < n
        xm = jnp.where(valid, x_t, 0.0)   # kill garbage (incl. NaN) tail rows

        # One-hot with the class index on the sublane axis -> (c_pad, tile_n).
        classes = jax.lax.broadcasted_iota(jnp.int32, (c_pad, tile_n), 0)
        onehot = (y_row == classes).astype(jnp.float32)

        # Single fused matmul: contraction over the batch tile.
        rhs = jnp.concatenate(
            [xm, xm * xm, jnp.ones((tile_n, 1), jnp.float32)], axis=1)
        stats = jnp.dot(onehot, rhs,
                        preferred_element_type=jnp.float32,
                        precision=jax.lax.Precision.HIGHEST)
        stat_ref[...] += stats.reshape(1, c_pad, w)

    row_block = lambda p, i: (p * tiles_per_split + i, 0)
    stats_out = pl.pallas_call(
        kernel,
        out_shape=jax.ShapeDtypeStruct((num_splits, c_pad, w), jnp.float32),
        grid=(num_splits, tiles_per_split),
        in_specs=[
            pl.BlockSpec((1, 1, tile_n),
                         lambda p, i: (p * tiles_per_split + i, 0, 0)),
            pl.BlockSpec((tile_n, f), row_block),
        ],
        out_specs=pl.BlockSpec((1, c_pad, w), lambda p, i: (p, 0, 0)),
        compiler_params=pltpu.CompilerParams(
            dimension_semantics=("parallel", "arbitrary")),
    )(y3, x)

    # ---- tiny O(C*F) combine outside the kernel ----
    stats = jnp.sum(stats_out, axis=0)[:c]          # (c, 2f+1)
    sum_x = stats[:, :f]                            # per-class sum of x
    sum_xx = jnp.sum(stats[:, f:2 * f], axis=1)     # per-class sum of ||x||^2
    cnt = stats[:, 2 * f]                           # per-class count
    cross = jnp.sum(sum_x * center, axis=1)
    cnorm = jnp.sum(center * center, axis=1)
    per_class = sum_xx - 2.0 * cross + cnt * cnorm  # per-class sum ||x - c_y||^2
    per_class = jnp.where(cnt > 0, per_class / jnp.maximum(cnt, 1.0), 0.0)
    return jnp.asarray(lamda, jnp.float32) * 0.5 / n * jnp.sum(per_class)


def center_loss_ref(x, y, center, lamda):
    """Pure-JAX reference mirroring the PyTorch forward."""
    y = y.astype(jnp.int32)
    center_exp = center[y]                                        # (N, F)
    count = jnp.sum(y[:, None] == jnp.arange(center.shape[0])[None, :],
                    axis=0).astype(jnp.float32)                   # (C,)
    count_exp = count[y]                                          # (N,)
    per_sample = jnp.sum((x - center_exp) ** 2, axis=1) / count_exp
    return lamda / 2 * jnp.mean(per_sample)


if __name__ == "__main__":
    cls_num, feat_num = 10, 32
    lamda = 2.0
    key = jax.random.PRNGKey(0)
    k_center, k_x, k_y, k_x2, k_y2, k_x3, k_y3 = jax.random.split(key, 7)

    center = jax.random.normal(k_center, (cls_num, feat_num), dtype=jnp.float32)

    # Case 1: tiny batch, single exact block.
    x_s = jax.random.normal(k_x, (8, feat_num), dtype=jnp.float32)
    y_s = jax.random.randint(k_y, (8,), 0, cls_num, dtype=jnp.int32)
    loss_s = jax.block_until_ready(center_loss(x_s, y_s, center, lamda))
    ref_s = jax.block_until_ready(center_loss_ref(x_s, y_s, center, lamda))
    assert jnp.allclose(loss_s, ref_s, rtol=5e-4, atol=1e-5), (loss_s, ref_s)

    # Case 2: unaligned batch, single partial block (exercises the tail mask,
    # no x padding in HBM).
    x_l = jax.random.normal(k_x2, (300, feat_num), dtype=jnp.float32)
    y_l = jax.random.randint(k_y2, (300,), 0, cls_num, dtype=jnp.int32)
    loss_l = jax.block_until_ready(center_loss(x_l, y_l, center, lamda))
    ref_l = jax.block_until_ready(center_loss_ref(x_l, y_l, center, lamda))
    assert jnp.allclose(loss_l, ref_l, rtol=5e-4, atol=1e-5), (loss_l, ref_l)

    # Case 3: multi-tile accumulation + 2-way parallel split + partial tail
    # block (grid (2, 5) with 64-row tiles, last tile has 24 valid rows).
    x_t = jax.random.normal(k_x3, (600, feat_num), dtype=jnp.float32)
    y_t = jax.random.randint(k_y3, (600,), 0, cls_num, dtype=jnp.int32)
    loss_t = jax.block_until_ready(
        center_loss(x_t, y_t, center, lamda, tile_n=64, num_splits=2))
    ref_t = jax.block_until_ready(center_loss_ref(x_t, y_t, center, lamda))
    assert jnp.allclose(loss_t, ref_t, rtol=5e-4, atol=1e-5), (loss_t, ref_t)

    print("KERNEL_OK")
</pallas_src>

<mosaic_0001>
module attributes {stable_mosaic.version = 11 : i64} {
  func.func @kernel(%arg0: i32, %arg1: i32, %arg2: memref<1x1x8xi32, #tpu.memory_space<vmem>>, %arg3: memref<8x32xf32, #tpu.memory_space<vmem>>, %arg4: memref<1x16x65xf32, #tpu.memory_space<vmem>>) attributes {dimension_semantics = [#tpu.dimension_semantics<parallel>, #tpu.dimension_semantics<arbitrary>], iteration_bounds = array<i64: 1, 1>, scalar_prefetch = 0 : i64, scratch_operands = 0 : i64, tpu.core_type = #tpu.core_type<tc>, window_params = [{transform_indices = @transform_0, window_bounds = array<i64: 1, 1, 8>}, {transform_indices = @transform_1, window_bounds = array<i64: 8, 32>}, {transform_indices = @transform_2, window_bounds = array<i64: 1, 16, 65>}]} {
    %c0_i32 = arith.constant 0 : i32
    %0 = arith.cmpi eq, %arg1, %c0_i32 : i32
    %1 = arith.extui %0 : i1 to i32
    %c0_i32_0 = arith.constant 0 : i32
    %2 = arith.cmpi ne, %1, %c0_i32_0 : i32
    scf.if %2 {
      %cst_14 = arith.constant 0.000000e+00 : f32
      %31 = vector.broadcast %cst_14 : f32 to vector<1x16x65xf32>
      %c0_15 = arith.constant 0 : index
      %c0_16 = arith.constant 0 : index
      %c0_17 = arith.constant 0 : index
      %32 = vector.load %arg4[%c0_15, %c0_16, %c0_17] : memref<1x16x65xf32, #tpu.memory_space<vmem>>, vector<1x16x65xf32>
      tpu.vector_store %arg4[%c0_15, %c0_16, %c0_17], %31 {strides = array<i32>} : memref<1x16x65xf32, #tpu.memory_space<vmem>>, vector<1x16x65xf32>,
    } else {
    }
    %c1_i32 = arith.constant 1 : i32
    %3 = arith.muli %arg0, %c1_i32 : i32
    %4 = arith.addi %3, %arg1 : i32
    %c0 = arith.constant 0 : index
    %c0_1 = arith.constant 0 : index
    %c0_2 = arith.constant 0 : index
    %5 = vector.load %arg2[%c0, %c0_1, %c0_2] : memref<1x1x8xi32, #tpu.memory_space<vmem>>, vector<1x1x8xi32>
    %6 = vector.shape_cast %5 : vector<1x1x8xi32> to vector<1x8xi32>
    %c0_3 = arith.constant 0 : index
    %c0_4 = arith.constant 0 : index
    %7 = vector.load %arg3[%c0_3, %c0_4] : memref<8x32xf32, #tpu.memory_space<vmem>>, vector<8x32xf32>
    %8 = tpu.iota {dimensions = array<i32: 0>} : vector<8x1xi32>
    %c8_i32 = arith.constant 8 : i32
    %9 = arith.muli %4, %c8_i32 : i32
    %10 = vector.broadcast %9 : i32 to vector<8x1xi32>
    %11 = arith.addi %10, %8 : vector<8x1xi32>
    %c8_i32_5 = arith.constant 8 : i32
    %12 = vector.broadcast %c8_i32_5 : i32 to vector<8x1xi32>
    %13 = arith.cmpi slt, %11, %12 : vector<8x1xi32>
    %cst = arith.constant 0.000000e+00 : f32
    %14 = vector.shape_cast %13 : vector<8x1xi1> to vector<8x1xi1>
    %15 = vector.broadcast %14 : vector<8x1xi1> to vector<8x32xi1>
    %16 = vector.broadcast %cst : f32 to vector<8x32xf32>
    %17 = arith.select %15, %7, %16 : vector<8x32xi1>, vector<8x32xf32>
    %18 = tpu.iota {dimensions = array<i32: 0>} : vector<16x8xi32>
    %19 = vector.broadcast %6 : vector<1x8xi32> to vector<16x8xi32>
    %20 = arith.cmpi eq, %19, %18 : vector<16x8xi32>
    %21 = arith.extui %20 : vector<16x8xi1> to vector<16x8xi32>
    %22 = arith.sitofp %21 : vector<16x8xi32> to vector<16x8xf32>
    %23 = arith.mulf %17, %17 : vector<8x32xf32>
    %cst_6 = arith.constant 1.000000e+00 : f32
    %24 = vector.broadcast %cst_6 : f32 to vector<8x1xf32>
    %25 = tpu.concatenate %17, %23, %24 in 1 : vector<8x32xf32>, vector<8x32xf32>, vector<8x1xf32> -> vector<8x65xf32>
    %cst_7 = arith.constant dense<0.000000e+00> : vector<16x65xf32>
    %26 = tpu.matmul %22, %25, %cst_7 {dimension_numbers = #tpu.dot_dimension_numbers<[1], [0], [0], [1], [0, 0, 1, 1], [], []>, precision = #tpu.contract_precision<fp32>} : vector<16x8xf32>, vector<8x65xf32>, vector<16x65xf32> -> vector<16x65xf32>
    %c0_8 = arith.constant 0 : index
    %c0_9 = arith.constant 0 : index
    %c0_10 = arith.constant 0 : index
    %27 = vector.load %arg4[%c0_8, %c0_9, %c0_10] : memref<1x16x65xf32, #tpu.memory_space<vmem>>, vector<1x16x65xf32>
    %28 = vector.shape_cast %26 : vector<16x65xf32> to vector<1x16x65xf32>
    %29 = arith.addf %27, %28 : vector<1x16x65xf32>
    %c0_11 = arith.constant 0 : index
    %c0_12 = arith.constant 0 : index
    %c0_13 = arith.constant 0 : index
    %30 = vector.load %arg4[%c0_11, %c0_12, %c0_13] : memref<1x16x65xf32, #tpu.memory_space<vmem>>, vector<1x16x65xf32>
    tpu.vector_store %arg4[%c0_11, %c0_12, %c0_13], %29 {strides = array<i32>} : memref<1x16x65xf32, #tpu.memory_space<vmem>>, vector<1x16x65xf32>,
    return
  }
  func.func @transform_0(%arg0: i32, %arg1: i32) -> (i32, i32, i32) {
    %c1_i32 = arith.constant 1 : i32
    %0 = arith.muli %arg0, %c1_i32 : i32
    %1 = arith.addi %0, %arg1 : i32
    %c0_i32 = arith.constant 0 : i32
    %c0_i32_0 = arith.constant 0 : i32
    %c0_i32_1 = arith.constant 0 : i32
    return %1, %c0_i32, %c0_i32_0 : i32, i32, i32
  }
  func.func @transform_1(%arg0: i32, %arg1: i32) -> (i32, i32) {
    %c1_i32 = arith.constant 1 : i32
    %0 = arith.muli %arg0, %c1_i32 : i32
    %1 = arith.addi %0, %arg1 : i32
    %c0_i32 = arith.constant 0 : i32
    %c0_i32_0 = arith.constant 0 : i32
    return %1, %c0_i32 : i32, i32
  }
  func.func @transform_2(%arg0: i32, %arg1: i32) -> (i32, i32, i32) {
    %c0_i32 = arith.constant 0 : i32
    %c0_i32_0 = arith.constant 0 : i32
    %c0_i32_1 = arith.constant 0 : i32
    return %arg0, %c0_i32, %c0_i32_0 : i32, i32, i32
  }
}

</mosaic_0001>

<llo_original>
// kernel: tpu_custom_call.1
$region0: #{tpu_custom_call.1}
  #allocation0 [shape = 'u32[]', space=smem, size = 0x4, offset = 0x4, fixed_abs, tag = 'smem constant byte address 0x4 - core index']
  #allocation1 [shape = 'u32[72,128]{1,0:T(1,128)}', space=vmem, size = 0x9000, scoped, tag = 'internal scratch']
  %s0 = inlined_call_operand.hbm [shape: s32[1,1,8], index: 0, kind: input, shape index: {}]
  %s1 = inlined_call_operand.hbm [shape: f32[8,32], index: 1, kind: input, shape index: {}]
  %s2 = inlined_call_operand.hbm [shape: f32[1,16,65], index: 2, kind: output, shape index: {}]
  %s3 = sld [smem:[#allocation0]]
  $region30: #{tpu_custom_call.1} parent=0
    _
  %s5 = ssub.s32 1, %s3
  %s6 = scalar_select 0, %s5, %s3
  $region1: #{tpu_custom_call.1} parent=0
    #allocation2 [shape = 'u8[512]{0}', space=vmem, size = 0x400, scoped, tag = 'input window, operand 0, single buffered']
    #allocation3 [shape = 's32[1]{0}', space=sflag, size = 0x4, scoped, tag = 'scoped memory for tpu_custom_call.1']
    #allocation4 [shape = 's32[1]{0}', space=sflag, size = 0x4, scoped, tag = 'scoped memory for tpu_custom_call.1']
    #allocation5 [shape = 'u8[4096]{0}', space=vmem, size = 0x1000, scoped, tag = 'input window, operand 1, single buffered']
    #allocation6 [shape = 's32[1]{0}', space=sflag, size = 0x4, scoped, tag = 'scoped memory for tpu_custom_call.1']
    #allocation7 [shape = 'u8[8192]{0}', space=vmem, size = 0x2000, scoped, tag = 'output window, operand 0, single buffered']
    %7 = vsyncpa [#allocation3], 0
    %8 = vsyncpa [#allocation6], 0
    %9 = vsyncpa [#allocation4], 0
    // Predicated region
    $region2: #{tpu_custom_call.1} parent=1 // pred_check
      _
    $region3: #{tpu_custom_call.1} parent=1 // pred_check_branch
      %11 = sbr.rel (0) target = $region5
    $region4: #{tpu_custom_call.1} parent=1 // pred_region
      %s12 = sadd.s32 0, 0
      %14 = vsyncadd [#allocation3], 0
      %s15 = scalar_lea.hbm %s0, %s12
      %s17 = sshll.u32 %s15, 4
      %s18 = int_to_ptr.hbm [resolvable:$true] %s17
      %s19 = sshll.u32 [#allocation2], 4
      %s20 = int_to_ptr.vmem [resolvable:$true] %s19
      %22 = dma.hbm_to_vmem [thread:$0]  %s18, 16, %s20, [#allocation3]
    $region5: #{tpu_custom_call.1} parent=1 // pred_fallthru
      _
    // Predicated region
    $region6: #{tpu_custom_call.1} parent=1 // pred_check
      _
    $region7: #{tpu_custom_call.1} parent=1 // pred_check_branch
      %24 = sbr.rel (0) target = $region9
    $region8: #{tpu_custom_call.1} parent=1 // pred_region
      %s25 = sadd.s32 0, 0
      %27 = vsyncadd [#allocation6], 0
      %s28 = smul.addr %s25, 8
      %s29 = scalar_lea.hbm %s1, %s28
      %s31 = sshll.u32 %s29, 4
      %s32 = int_to_ptr.hbm [resolvable:$true] %s31
      %s33 = sshll.u32 [#allocation5], 4
      %s34 = int_to_ptr.vmem [resolvable:$true] %s33
      %36 = dma.hbm_to_vmem [thread:$0]  %s32, 128, %s34, [#allocation6]
    $region9: #{tpu_custom_call.1} parent=1 // pred_fallthru
      _
    // Predicated region
    $region10: #{tpu_custom_call.1} parent=1 // pred_check
      _
    $region11: #{tpu_custom_call.1} parent=1 // pred_check_branch
      %38 = sbr.rel (0) target = $region13
    $region12: #{tpu_custom_call.1} parent=1 // pred_region
      %40 = dma.done [#allocation3], 16
    $region13: #{tpu_custom_call.1} parent=1 // pred_fallthru
      _
    // Predicated region
    $region14: #{tpu_custom_call.1} parent=1 // pred_check
      _
    $region15: #{tpu_custom_call.1} parent=1 // pred_check_branch
      %42 = sbr.rel (0) target = $region17
    $region16: #{tpu_custom_call.1} parent=1 // pred_region
      %44 = dma.done [#allocation6], 128
    $region17: #{tpu_custom_call.1} parent=1 // pred_fallthru
      _
    %s45 = sadd.s32 0, 0
    %s46 = sadd.s32 0, 0
    %p47 = scmp.eq.s32.totalorder 0, 0
    // Predicated region
    $region18: #{tpu_custom_call.1} parent=1 // pred_check
      %p48 = pneg %p47
    $region19: #{tpu_custom_call.1} parent=1 // pred_check_branch
      %50 = sbr.rel (%p48) target = $region21
    $region20: #{tpu_custom_call.1} parent=1 // pred_region
      %vm51 = vcmask 531456
      %52 = vst.msk [vmem:[#allocation7] sm:$0xff] %vm51, 0.0
      %53 = vst.msk [vmem:[#allocation7 + $0x8] sm:$0xff] %vm51, 0.0
    $region21: #{tpu_custom_call.1} parent=1 // pred_fallthru
      _
    %s54 = sadd.s32 0, 0
    %v55 = vld [vmem:[#allocation2] sm:$0x1]
    %v56 = vld [vmem:[#allocation5] sm:$0xff]
    %v57 = vlaneseq
    %v58 = vshrl.u32 %v57, 7
    %s59 = smul.u32 %s54, 8
    %v60 = vstv %s59
    %v61 = vadd.s32 %v60, %v58
    %vm62 = vcmp.lt.s32.totalorder %v61, 8
    %v63 = vsel %vm62, 1, 0
    %vm64 = vcmp.eq.s32.totalorder %v63, 1
    %v65 = vsel %vm64, %v56, 0.0
    %v66 = vadd.s32 %v58, 8
    %v67 = vperm.slane %v55, 0
    %vm68 = vcmp.eq.s32.totalorder %v67, %v58
    %vm69 = vcmp.eq.s32.totalorder %v67, %v66
    %v70 = vsel %vm68, 1, 0
    %v71 = vsel %vm69, 1, 0
    %v72 = vcvt.s32.f32 %v70
    %v73 = vcvt.s32.f32 %v71
    %v74 = vmul.f32 %v65, %v65
    %76 = vrot.lane.b32.xlu0 %v74, 32
    %v77 = vpop.permute.xlu0 %76
    %vm79 = vcmask 261120
    %v80 = vsel %vm79, %v65, %v77
    %vm81 = vcmask 523264
    %v82 = vsel %vm81, %v80, 1.0
    %vm83 = vcmask 64512
    %v85 = vsel %vm83, %v72, 0
    %v88 = vsel %vm83, %v73, 0
    %90 = vmatpush.msra.mxu0 0.0
    %91 = vmatpush.msra.mxu0 0.0
    %92 = vmatpush.msra.mxu0 0.0
    %93 = vmatpush.msra.mxu0 0.0
    %94 = vmatpush.msra.mxu0 0.0
    %95 = vmatpush.msra.mxu0 0.0
    %96 = vmatpush.msra.mxu0 0.0
    %97 = vmatpush.msra.mxu0 0.0
    %98 = vmatpush.msra.mxu0 0.0
    %99 = vmatpush.msra.mxu0 0.0
    %100 = vmatpush.msra.mxu0 0.0
    %101 = vmatpush.msra.mxu0 0.0
    %102 = vmatpush.msra.mxu0 0.0
    %103 = vmatpush.msra.mxu0 0.0
    %104 = vmatpush.msra.mxu0 0.0
    %v105 = vand.u32 %v82, 4294901760
    %106 = vmatpush.msra.mxu0 %v105
    %v107 = vand.u32 %v85, 4294901760
    %v108 = vsub.f32 %v85, %v107
    %v109 = vand.u32 %v108, 4294901760
    %v110 = vsub.f32 %v108, %v109
    %v111 = vand.u32 %v110, 4294901760
    %112 = vmatmul.f32.gmra.mxu0 %v111
    %v113 = vpop.f32.mrf.mxu0
    %v114 = vadd.f32 0.0, %v113
    %v115 = vand.u32 %v88, 4294901760
    %v116 = vsub.f32 %v88, %v115
    %v117 = vand.u32 %v116, 4294901760
    %v118 = vsub.f32 %v116, %v117
    %v119 = vand.u32 %v118, 4294901760
    %120 = vmatmul.f32.gmra.mxu0 %v119
    %v121 = vpop.f32.mrf.mxu0
    %v122 = vadd.f32 0.0, %v121
    %123 = vdwg.mxu0
    %124 = vmatpush.msra.mxu0 0.0
    %125 = vmatpush.msra.mxu0 0.0
    %126 = vmatpush.msra.mxu0 0.0
    %127 = vmatpush.msra.mxu0 0.0
    %128 = vmatpush.msra.mxu0 0.0
    %129 = vmatpush.msra.mxu0 0.0
    %130 = vmatpush.msra.mxu0 0.0
    %131 = vmatpush.msra.mxu0 0.0
    %132 = vmatpush.msra.mxu0 0.0
    %133 = vmatpush.msra.mxu0 0.0
    %134 = vmatpush.msra.mxu0 0.0
    %135 = vmatpush.msra.mxu0 0.0
    %136 = vmatpush.msra.mxu0 0.0
    %137 = vmatpush.msra.mxu0 0.0
    %138 = vmatpush.msra.mxu0 0.0
    %v139 = vand.u32 %v82, 4294901760
    %v140 = vsub.f32 %v82, %v139
    %v141 = vand.u32 %v140, 4294901760
    %v142 = vsub.f32 %v140, %v141
    %v143 = vand.u32 %v142, 4294901760
    %144 = vmatpush.msra.mxu0 %v143
    %v145 = vand.u32 %v85, 4294901760
    %146 = vmatmul.f32.gmra.mxu0 %v145
    %v147 = vpop.f32.mrf.mxu0
    %v148 = vadd.f32 %v114, %v147
    %v149 = vand.u32 %v88, 4294901760
    %150 = vmatmul.f32.gmra.mxu0 %v149
    %v151 = vpop.f32.mrf.mxu0
    %v152 = vadd.f32 %v122, %v151
    %153 = vdwg.mxu0
    %154 = vmatpush.msra.mxu0 0.0
    %155 = vmatpush.msra.mxu0 0.0
    %156 = vmatpush.msra.mxu0 0.0
    %157 = vmatpush.msra.mxu0 0.0
    %158 = vmatpush.msra.mxu0 0.0
    %159 = vmatpush.msra.mxu0 0.0
    %160 = vmatpush.msra.mxu0 0.0
    %161 = vmatpush.msra.mxu0 0.0
    %162 = vmatpush.msra.mxu0 0.0
    %163 = vmatpush.msra.mxu0 0.0
    %164 = vmatpush.msra.mxu0 0.0
    %165 = vmatpush.msra.mxu0 0.0
    %166 = vmatpush.msra.mxu0 0.0
    %167 = vmatpush.msra.mxu0 0.0
    %168 = vmatpush.msra.mxu0 0.0
    %v169 = vand.u32 %v82, 4294901760
    %v170 = vsub.f32 %v82, %v169
    %171 = vmatpush.msra.mxu0 %v170
    %v172 = vand.u32 %v85, 4294901760
    %v173 = vsub.f32 %v85, %v172
    %174 = vmatmul.f32.gmra.mxu0 %v173
    %v175 = vpop.f32.mrf.mxu0
    %v176 = vadd.f32 %v148, %v175
    %v177 = vand.u32 %v88, 4294901760
    %v178 = vsub.f32 %v88, %v177
    %179 = vmatmul.f32.gmra.mxu0 %v178
    %v180 = vpop.f32.mrf.mxu0
    %v181 = vadd.f32 %v152, %v180
    %182 = vdwg.mxu0
    %183 = vmatpush.msra.mxu0 0.0
    %184 = vmatpush.msra.mxu0 0.0
    %185 = vmatpush.msra.mxu0 0.0
    %186 = vmatpush.msra.mxu0 0.0
    %187 = vmatpush.msra.mxu0 0.0
    %188 = vmatpush.msra.mxu0 0.0
    %189 = vmatpush.msra.mxu0 0.0
    %190 = vmatpush.msra.mxu0 0.0
    %191 = vmatpush.msra.mxu0 0.0
    %192 = vmatpush.msra.mxu0 0.0
    %193 = vmatpush.msra.mxu0 0.0
    %194 = vmatpush.msra.mxu0 0.0
    %195 = vmatpush.msra.mxu0 0.0
    %196 = vmatpush.msra.mxu0 0.0
    %197 = vmatpush.msra.mxu0 0.0
    %v198 = vand.u32 %v82, 4294901760
    %199 = vmatpush.msra.mxu0 %v198
    %v200 = vand.u32 %v85, 4294901760
    %v201 = vsub.f32 %v85, %v200
    %v202 = vand.u32 %v201, 4294901760
    %203 = vmatmul.f32.gmra.mxu0 %v202
    %v204 = vpop.f32.mrf.mxu0
    %v205 = vadd.f32 %v176, %v204
    %v206 = vand.u32 %v88, 4294901760
    %v207 = vsub.f32 %v88, %v206
    %v208 = vand.u32 %v207, 4294901760
    %209 = vmatmul.f32.gmra.mxu0 %v208
    %v210 = vpop.f32.mrf.mxu0
    %v211 = vadd.f32 %v181, %v210
    %212 = vdwg.mxu0
    %213 = vmatpush.msra.mxu0 0.0
    %214 = vmatpush.msra.mxu0 0.0
    %215 = vmatpush.msra.mxu0 0.0
    %216 = vmatpush.msra.mxu0 0.0
    %217 = vmatpush.msra.mxu0 0.0
    %218 = vmatpush.msra.mxu0 0.0
    %219 = vmatpush.msra.mxu0 0.0
    %220 = vmatpush.msra.mxu0 0.0
    %221 = vmatpush.msra.mxu0 0.0
    %222 = vmatpush.msra.mxu0 0.0
    %223 = vmatpush.msra.mxu0 0.0
    %224 = vmatpush.msra.mxu0 0.0
    %225 = vmatpush.msra.mxu0 0.0
    %226 = vmatpush.msra.mxu0 0.0
    %227 = vmatpush.msra.mxu0 0.0
    %v228 = vand.u32 %v82, 4294901760
    %v229 = vsub.f32 %v82, %v228
    %v230 = vand.u32 %v229, 4294901760
    %231 = vmatpush.msra.mxu0 %v230
    %v232 = vand.u32 %v85, 4294901760
    %233 = vmatmul.f32.gmra.mxu0 %v232
    %v234 = vpop.f32.mrf.mxu0
    %v235 = vadd.f32 %v205, %v234
    %v236 = vand.u32 %v88, 4294901760
    %237 = vmatmul.f32.gmra.mxu0 %v236
    %v238 = vpop.f32.mrf.mxu0
    %v239 = vadd.f32 %v211, %v238
    %240 = vdwg.mxu0
    %241 = vmatpush.msra.mxu0 0.0
    %242 = vmatpush.msra.mxu0 0.0
    %243 = vmatpush.msra.mxu0 0.0
    %244 = vmatpush.msra.mxu0 0.0
    %245 = vmatpush.msra.mxu0 0.0
    %246 = vmatpush.msra.mxu0 0.0
    %247 = vmatpush.msra.mxu0 0.0
    %248 = vmatpush.msra.mxu0 0.0
    %249 = vmatpush.msra.mxu0 0.0
    %250 = vmatpush.msra.mxu0 0.0
    %251 = vmatpush.msra.mxu0 0.0
    %252 = vmatpush.msra.mxu0 0.0
    %253 = vmatpush.msra.mxu0 0.0
    %254 = vmatpush.msra.mxu0 0.0
    %255 = vmatpush.msra.mxu0 0.0
    %v256 = vand.u32 %v82, 4294901760
    %257 = vmatpush.msra.mxu0 %v256
    %v258 = vand.u32 %v85, 4294901760
    %259 = vmatmul.f32.gmra.mxu0 %v258
    %v260 = vpop.f32.mrf.mxu0
    %v261 = vadd.f32 %v235, %v260
    %v262 = vand.u32 %v88, 4294901760
    %263 = vmatmul.f32.gmra.mxu0 %v262
    %v264 = vpop.f32.mrf.mxu0
    %v265 = vadd.f32 %v239, %v264
    %266 = vdwg.mxu0
    %v267 = vld [vmem:[#allocation7] sm:$0xff]
    %v268 = vld [vmem:[#allocation7 + $0x8] sm:$0xff]
    %v269 = vadd.f32 %v267, %v261
    %v270 = vadd.f32 %v268, %v265
    %vm271 = vcmask 531456
    %272 = vst.msk [vmem:[#allocation7] sm:$0xff] %vm271, %v269
    %273 = vst.msk [vmem:[#allocation7 + $0x8] sm:$0xff] %vm271, %v270
    // Predicated region
    $region22: #{tpu_custom_call.1} parent=1 // pred_check
      _
    $region23: #{tpu_custom_call.1} parent=1 // pred_check_branch
      %275 = sbr.rel (0) target = $region25
    $region24: #{tpu_custom_call.1} parent=1 // pred_region
      %277 = vsyncadd [#allocation4], 0
      %s278 = sshll.u32 [#allocation7], 4
      %s279 = int_to_ptr.vmem [resolvable:$true] %s278
      %s280 = sshll.u32 %s2, 4
      %s281 = int_to_ptr.hbm [resolvable:$true] %s280
      %286 = dma.vmem_to_hbm [thread:$0]  %s279, 256, %s281, [#allocation4], 128, 128, 8
    $region25: #{tpu_custom_call.1} parent=1 // pred_fallthru
      _
    // Predicated region
    $region26: #{tpu_custom_call.1} parent=1 // pred_check
      _
    $region27: #{tpu_custom_call.1} parent=1 // pred_check_branch
      %288 = sbr.rel (0) target = $region29
    $region28: #{tpu_custom_call.1} parent=1 // pred_region
      %290 = dma.done [#allocation4], 256
    $region29: #{tpu_custom_call.1} parent=1 // pred_fallthru
      _
    %291 = vsyncpa [#allocation3], 1
    %292 = vsyncpa [#allocation6], 1
    %293 = vsyncpa [#allocation4], 1

</llo_original>
